<compile_context>
chip_gen: v7x
topology: tpu7x:2x2x1
jax: 0.10.0
libtpu: 0.0.40
codegen_flags: <defaults>
</compile_context>

<pallas_src>
import jax
import jax.numpy as jnp
import numpy as np
from jax.experimental import pallas as pl
from jax.experimental.pallas import tpu as pltpu


def _sigmoid(x):
    # Single EUP op (tanh) per sigmoid instead of exp + divide.
    return 0.5 * jnp.tanh(0.5 * x) + 0.5


def _gates_to_state(gates, c_prev, hid):
    """gates: (b, 4H) f32, gate order matches torch.chunk(4, 1): [i, f, g, o]."""
    i_t = _sigmoid(gates[:, 0 * hid:1 * hid])
    f_t = _sigmoid(gates[:, 1 * hid:2 * hid])
    g_t = jnp.tanh(gates[:, 2 * hid:3 * hid])
    o_t = _sigmoid(gates[:, 3 * hid:4 * hid])
    cy = c_prev * f_t + i_t * g_t
    hy = o_t * jnp.tanh(cy)
    return hy, cy


# ----------------------------------------------------------------------------
# Single-step kernel (matches LSTMCell.forward exactly).
# ----------------------------------------------------------------------------
def _lstm_cell_kernel(x_ref, h_ref, c_ref, wx_ref, wh_ref, b_ref,
                      hy_ref, cy_ref):
    hid = hy_ref.shape[1]
    # Two accumulating MXU dots; f32 accumulation regardless of weight dtype.
    gates = (
        jnp.dot(x_ref[...].astype(wx_ref.dtype), wx_ref[...],
                preferred_element_type=jnp.float32)
        + jnp.dot(h_ref[...].astype(wh_ref.dtype), wh_ref[...],
                  preferred_element_type=jnp.float32)
        + b_ref[...])
    hy, cy = _gates_to_state(gates, c_ref[...].astype(jnp.float32), hid)
    hy_ref[...] = hy.astype(hy_ref.dtype)
    cy_ref[...] = cy.astype(cy_ref.dtype)


# ----------------------------------------------------------------------------
# Sequence kernel: T LSTMCell steps inside ONE pallas_call.
# Weights stay VMEM-resident across all steps; h/c are carried in VMEM scratch.
# ----------------------------------------------------------------------------
def _lstm_seq_kernel(x_ref, h0_ref, c0_ref, wx_ref, wh_ref, b_ref,
                     hseq_ref, cy_ref, h_sc, c_sc):
    t = pl.program_id(0)
    hid = h_sc.shape[1]

    @pl.when(t == 0)
    def _():
        h_sc[...] = h0_ref[...].astype(jnp.float32)
        c_sc[...] = c0_ref[...].astype(jnp.float32)

    gates = (
        jnp.dot(x_ref[0].astype(wx_ref.dtype), wx_ref[...],
                preferred_element_type=jnp.float32)
        + jnp.dot(h_sc[...].astype(wh_ref.dtype), wh_ref[...],
                  preferred_element_type=jnp.float32)
        + b_ref[...])
    hy, cy = _gates_to_state(gates, c_sc[...], hid)

    h_sc[...] = hy
    c_sc[...] = cy
    hseq_ref[0] = hy.astype(hseq_ref.dtype)
    cy_ref[...] = cy.astype(cy_ref.dtype)


# ----------------------------------------------------------------------------
# One-time parameter prep (NOT on the per-step path).
# ----------------------------------------------------------------------------
def prepare_lstm_params(w_xh, b_xh, w_hh, b_hh, compute_dtype=jnp.bfloat16):
    """w_xh: (4H, input_size), w_hh: (4H, H)  (PyTorch nn.Linear convention).

    Returns:
      w_x_t: (input_size, 4H)  weight for the x dot (compute_dtype)
      w_h_t: (H, 4H)           weight for the h dot (compute_dtype)
      bias_row: (1, 4H) f32 = b_xh + b_hh  (zeros if bias=False)
    """
    four_h = w_xh.shape[0]
    if b_xh is None:
        b_xh = jnp.zeros((four_h,), jnp.float32)
    if b_hh is None:
        b_hh = jnp.zeros((four_h,), jnp.float32)
    w_x_t = w_xh.T.astype(compute_dtype)
    w_h_t = w_hh.T.astype(compute_dtype)
    bias_row = (b_xh.astype(jnp.float32)
                + b_hh.astype(jnp.float32)).reshape(1, four_h)
    return w_x_t, w_h_t, bias_row


def _pick_block_b(B):
    # Largest batch tile that divides B AND leaves >= 2 grid steps, so the
    # "parallel" axis actually feeds both v7x TensorCores; otherwise use the
    # whole batch (v5e/v6e have a single TC, extra tiles are pure overhead).
    for cand in (256, 128):
        if B >= 2 * cand and B % cand == 0:
            return cand
    return B


_VMEM_LIMIT = 64 * 1024 * 1024  # explicit scoped-VMEM budget (v5e default is 16 MiB)


def lstm_cell_pallas(x, hx, cx, w_x_t, w_h_t, bias_row, *, block_b=None):
    """One LSTMCell step.  x: (B, input_size); hx, cx: (B, H)."""
    B, in_size = x.shape
    H = hx.shape[1]
    assert w_x_t.shape == (in_size, 4 * H)
    assert w_h_t.shape == (H, 4 * H)
    assert bias_row.shape == (1, 4 * H)

    if block_b is None:
        block_b = _pick_block_b(B)
    assert B % block_b == 0, f"block_b={block_b} must divide batch={B}"
    grid = (B // block_b,)

    w_bytes = (w_x_t.size * w_x_t.dtype.itemsize
               + w_h_t.size * w_h_t.dtype.itemsize
               + bias_row.size * bias_row.dtype.itemsize)
    io_bytes = (x.size + hx.size + cx.size + 2 * B * H) * x.dtype.itemsize
    cost = pl.CostEstimate(
        flops=2 * B * (in_size + H) * 4 * H + 10 * B * H,
        transcendentals=5 * B * H,
        bytes_accessed=int(w_bytes + io_bytes))

    hy, cy = pl.pallas_call(
        _lstm_cell_kernel,
        out_shape=(jax.ShapeDtypeStruct((B, H), x.dtype),
                   jax.ShapeDtypeStruct((B, H), x.dtype)),
        grid=grid,
        in_specs=[
            pl.BlockSpec((block_b, in_size), lambda i: (i, 0)),
            pl.BlockSpec((block_b, H), lambda i: (i, 0)),
            pl.BlockSpec((block_b, H), lambda i: (i, 0)),
            # Constant index_map: weights/bias are DMA'd once, VMEM-resident
            # across all batch tiles.
            pl.BlockSpec((in_size, 4 * H), lambda i: (0, 0)),
            pl.BlockSpec((H, 4 * H), lambda i: (0, 0)),
            pl.BlockSpec((1, 4 * H), lambda i: (0, 0)),
        ],
        out_specs=(
            pl.BlockSpec((block_b, H), lambda i: (i, 0)),
            pl.BlockSpec((block_b, H), lambda i: (i, 0)),
        ),
        compiler_params=pltpu.CompilerParams(
            dimension_semantics=("parallel",),
            vmem_limit_bytes=_VMEM_LIMIT),
        cost_estimate=cost,
    )(x, hx, cx, w_x_t, w_h_t, bias_row)
    return hy, cy


def lstm_sequence_pallas(x_seq, hx, cx, w_x_t, w_h_t, bias_row):
    """T LSTMCell steps inside one pallas_call.

    x_seq: (T, B, input_size); hx, cx: (B, H).
    Returns (h_seq, cy): h_seq (T, B, H) is hy of every step, cy (B, H) is the
    final cell state.  Weights are fetched from HBM once for all T steps.
    """
    T, B, in_size = x_seq.shape
    H = hx.shape[1]
    assert w_x_t.shape == (in_size, 4 * H)
    assert w_h_t.shape == (H, 4 * H)
    assert bias_row.shape == (1, 4 * H)

    w_bytes = (w_x_t.size * w_x_t.dtype.itemsize
               + w_h_t.size * w_h_t.dtype.itemsize
               + bias_row.size * bias_row.dtype.itemsize)
    io_bytes = (x_seq.size + hx.size + cx.size
                + T * B * H + B * H) * x_seq.dtype.itemsize
    cost = pl.CostEstimate(
        flops=2 * T * B * (in_size + H) * 4 * H + 10 * T * B * H,
        transcendentals=5 * T * B * H,
        bytes_accessed=int(w_bytes + io_bytes))

    h_seq, cy = pl.pallas_call(
        _lstm_seq_kernel,
        out_shape=(jax.ShapeDtypeStruct((T, B, H), x_seq.dtype),
                   jax.ShapeDtypeStruct((B, H), x_seq.dtype)),
        grid=(T,),
        in_specs=[
            pl.BlockSpec((1, B, in_size), lambda t: (t, 0, 0)),
            pl.BlockSpec((B, H), lambda t: (0, 0)),
            pl.BlockSpec((B, H), lambda t: (0, 0)),
            pl.BlockSpec((in_size, 4 * H), lambda t: (0, 0)),
            pl.BlockSpec((H, 4 * H), lambda t: (0, 0)),
            pl.BlockSpec((1, 4 * H), lambda t: (0, 0)),
        ],
        out_specs=(
            pl.BlockSpec((1, B, H), lambda t: (t, 0, 0)),
            pl.BlockSpec((B, H), lambda t: (0, 0)),
        ),
        scratch_shapes=[pltpu.VMEM((B, H), jnp.float32),   # h carry
                        pltpu.VMEM((B, H), jnp.float32)],  # c carry
        compiler_params=pltpu.CompilerParams(
            # Sequential dependence through the h/c scratch -> "arbitrary".
            dimension_semantics=("arbitrary",),
            vmem_limit_bytes=_VMEM_LIMIT),
        cost_estimate=cost,
    )(x_seq, hx, cx, w_x_t, w_h_t, bias_row)
    return h_seq, cy


def lstm_cell_ref(x, hx, cx, w_xh, b_xh, w_hh, b_hh):
    """Pure-JAX reference matching the PyTorch module."""
    gates = x @ w_xh.T + b_xh + hx @ w_hh.T + b_hh
    H = hx.shape[1]
    i_t = jax.nn.sigmoid(gates[:, 0 * H:1 * H])
    f_t = jax.nn.sigmoid(gates[:, 1 * H:2 * H])
    g_t = jnp.tanh(gates[:, 2 * H:3 * H])
    o_t = jax.nn.sigmoid(gates[:, 3 * H:4 * H])
    cy = cx * f_t + i_t * g_t
    hy = o_t * jnp.tanh(cy)
    return hy, cy


if __name__ == "__main__":
    B = 2
    input_size = 16
    hidden_size = 32
    T = 8

    key = jax.random.PRNGKey(0)
    k_x, k_h, k_c, k_wxh, k_bxh, k_whh, k_bhh, k_xs = jax.random.split(key, 8)

    # Parameter init mirroring reset_parameters(): uniform(-std, std),
    # std = 1/sqrt(hidden_size).
    std = 1.0 / np.sqrt(hidden_size)
    w_xh = jax.random.uniform(k_wxh, (4 * hidden_size, input_size),
                              jnp.float32, -std, std)
    b_xh = jax.random.uniform(k_bxh, (4 * hidden_size,), jnp.float32, -std, std)
    w_hh = jax.random.uniform(k_whh, (4 * hidden_size, hidden_size),
                              jnp.float32, -std, std)
    b_hh = jax.random.uniform(k_bhh, (4 * hidden_size,), jnp.float32, -std, std)

    x = jax.random.normal(k_x, (B, input_size), jnp.float32)
    hx = jax.random.normal(k_h, (B, hidden_size), jnp.float32)
    cx = jax.random.normal(k_c, (B, hidden_size), jnp.float32)
    x_seq = jax.random.normal(k_xs, (T, B, input_size), jnp.float32)

    # ---- single step, f32 weights: tight check against the reference ------
    w_x_f32, w_h_f32, bias_row = prepare_lstm_params(
        w_xh, b_xh, w_hh, b_hh, compute_dtype=jnp.float32)
    w_x_f32, w_h_f32, bias_row = jax.block_until_ready(
        (w_x_f32, w_h_f32, bias_row))

    step = jax.jit(lstm_cell_pallas)
    hy, cy = jax.block_until_ready(step(x, hx, cx, w_x_f32, w_h_f32, bias_row))
    hy_ref, cy_ref = lstm_cell_ref(x, hx, cx, w_xh, b_xh, w_hh, b_hh)
    np.testing.assert_allclose(np.asarray(hy), np.asarray(hy_ref),
                               rtol=1e-5, atol=1e-5)
    np.testing.assert_allclose(np.asarray(cy), np.asarray(cy_ref),
                               rtol=1e-5, atol=1e-5)

    # ---- single step, bf16 weights (default prep): looser tolerance -------
    w_x_bf, w_h_bf, bias_bf = prepare_lstm_params(w_xh, b_xh, w_hh, b_hh)
    hy_b, cy_b = jax.block_until_ready(step(x, hx, cx, w_x_bf, w_h_bf, bias_bf))
    np.testing.assert_allclose(np.asarray(hy_b), np.asarray(hy_ref),
                               rtol=2e-2, atol=2e-2)
    np.testing.assert_allclose(np.asarray(cy_b), np.asarray(cy_ref),
                               rtol=2e-2, atol=2e-2)

    # ---- T steps inside ONE pallas_call (weights fetched from HBM once) ---
    seq = jax.jit(lstm_sequence_pallas)
    h_seq, cy_T = jax.block_until_ready(
        seq(x_seq, hx, cx, w_x_f32, w_h_f32, bias_row))

    h_r, c_r = hx, cx
    h_seq_ref = []
    for t in range(T):
        h_r, c_r = lstm_cell_ref(x_seq[t], h_r, c_r, w_xh, b_xh, w_hh, b_hh)
        h_seq_ref.append(h_r)
    h_seq_ref = jnp.stack(h_seq_ref, axis=0)
    np.testing.assert_allclose(np.asarray(h_seq), np.asarray(h_seq_ref),
                               rtol=1e-4, atol=1e-4)
    np.testing.assert_allclose(np.asarray(cy_T), np.asarray(c_r),
                               rtol=1e-4, atol=1e-4)

    print("KERNEL_OK")
</pallas_src>

<mosaic_0001>
module attributes {stable_mosaic.version = 11 : i64} {
  func.func @_lstm_cell_kernel(%arg0: i32, %arg1: memref<2x16xf32, #tpu.memory_space<vmem>>, %arg2: memref<2x32xf32, #tpu.memory_space<vmem>>, %arg3: memref<2x32xf32, #tpu.memory_space<vmem>>, %arg4: memref<16x128xf32, #tpu.memory_space<vmem>>, %arg5: memref<32x128xf32, #tpu.memory_space<vmem>>, %arg6: memref<1x128xf32, #tpu.memory_space<vmem>>, %arg7: memref<2x32xf32, #tpu.memory_space<vmem>>, %arg8: memref<2x32xf32, #tpu.memory_space<vmem>>) attributes {dimension_semantics = [#tpu.dimension_semantics<parallel>], iteration_bounds = array<i64: 1>, scalar_prefetch = 0 : i64, scratch_operands = 0 : i64, tpu.core_type = #tpu.core_type<tc>, window_params = [{transform_indices = @transform_0, window_bounds = array<i64: 2, 16>}, {transform_indices = @transform_1, window_bounds = array<i64: 2, 32>}, {transform_indices = @transform_2, window_bounds = array<i64: 2, 32>}, {pipeline_mode = #tpu.pipeline_mode<synchronous>, transform_indices = @transform_3, window_bounds = array<i64: 16, 128>}, {pipeline_mode = #tpu.pipeline_mode<synchronous>, transform_indices = @transform_4, window_bounds = array<i64: 32, 128>}, {pipeline_mode = #tpu.pipeline_mode<synchronous>, transform_indices = @transform_5, window_bounds = array<i64: 1, 128>}, {transform_indices = @transform_6, window_bounds = array<i64: 2, 32>}, {transform_indices = @transform_7, window_bounds = array<i64: 2, 32>}]} {
    %c0 = arith.constant 0 : index
    %c0_0 = arith.constant 0 : index
    %0 = vector.load %arg1[%c0, %c0_0] : memref<2x16xf32, #tpu.memory_space<vmem>>, vector<2x16xf32>
    %c0_1 = arith.constant 0 : index
    %c0_2 = arith.constant 0 : index
    %1 = vector.load %arg4[%c0_1, %c0_2] : memref<16x128xf32, #tpu.memory_space<vmem>>, vector<16x128xf32>
    %cst = arith.constant dense<0.000000e+00> : vector<2x128xf32>
    %2 = tpu.matmul %0, %1, %cst {dimension_numbers = #tpu.dot_dimension_numbers<[1], [0], [0], [1], [0, 0, 1, 1], [], []>} : vector<2x16xf32>, vector<16x128xf32>, vector<2x128xf32> -> vector<2x128xf32>
    %c0_3 = arith.constant 0 : index
    %c0_4 = arith.constant 0 : index
    %3 = vector.load %arg2[%c0_3, %c0_4] : memref<2x32xf32, #tpu.memory_space<vmem>>, vector<2x32xf32>
    %c0_5 = arith.constant 0 : index
    %c0_6 = arith.constant 0 : index
    %4 = vector.load %arg5[%c0_5, %c0_6] : memref<32x128xf32, #tpu.memory_space<vmem>>, vector<32x128xf32>
    %cst_7 = arith.constant dense<0.000000e+00> : vector<2x128xf32>
    %5 = tpu.matmul %3, %4, %cst_7 {dimension_numbers = #tpu.dot_dimension_numbers<[1], [0], [0], [1], [0, 0, 1, 1], [], []>} : vector<2x32xf32>, vector<32x128xf32>, vector<2x128xf32> -> vector<2x128xf32>
    %6 = arith.addf %2, %5 : vector<2x128xf32>
    %c0_8 = arith.constant 0 : index
    %c0_9 = arith.constant 0 : index
    %7 = vector.load %arg6[%c0_8, %c0_9] : memref<1x128xf32, #tpu.memory_space<vmem>>, vector<1x128xf32>
    %8 = vector.broadcast %7 : vector<1x128xf32> to vector<2x128xf32>
    %9 = arith.addf %6, %8 : vector<2x128xf32>
    %c0_10 = arith.constant 0 : index
    %c0_11 = arith.constant 0 : index
    %10 = vector.load %arg3[%c0_10, %c0_11] : memref<2x32xf32, #tpu.memory_space<vmem>>, vector<2x32xf32>
    %11 = vector.extract_strided_slice %9 {offsets = [0, 0], sizes = [2, 32], strides = [1, 1]} : vector<2x128xf32> to vector<2x32xf32>
    %cst_12 = arith.constant 5.000000e-01 : f32
    %12 = vector.broadcast %cst_12 : f32 to vector<2x32xf32>
    %13 = arith.mulf %12, %11 : vector<2x32xf32>
    %14 = math.tanh %13 : vector<2x32xf32>
    %cst_13 = arith.constant 5.000000e-01 : f32
    %15 = vector.broadcast %cst_13 : f32 to vector<2x32xf32>
    %16 = arith.mulf %15, %14 : vector<2x32xf32>
    %cst_14 = arith.constant 5.000000e-01 : f32
    %17 = vector.broadcast %cst_14 : f32 to vector<2x32xf32>
    %18 = arith.addf %16, %17 : vector<2x32xf32>
    %19 = vector.extract_strided_slice %9 {offsets = [0, 32], sizes = [2, 32], strides = [1, 1]} : vector<2x128xf32> to vector<2x32xf32>
    %cst_15 = arith.constant 5.000000e-01 : f32
    %20 = vector.broadcast %cst_15 : f32 to vector<2x32xf32>
    %21 = arith.mulf %20, %19 : vector<2x32xf32>
    %22 = math.tanh %21 : vector<2x32xf32>
    %cst_16 = arith.constant 5.000000e-01 : f32
    %23 = vector.broadcast %cst_16 : f32 to vector<2x32xf32>
    %24 = arith.mulf %23, %22 : vector<2x32xf32>
    %cst_17 = arith.constant 5.000000e-01 : f32
    %25 = vector.broadcast %cst_17 : f32 to vector<2x32xf32>
    %26 = arith.addf %24, %25 : vector<2x32xf32>
    %27 = vector.extract_strided_slice %9 {offsets = [0, 64], sizes = [2, 32], strides = [1, 1]} : vector<2x128xf32> to vector<2x32xf32>
    %28 = math.tanh %27 : vector<2x32xf32>
    %29 = vector.extract_strided_slice %9 {offsets = [0, 96], sizes = [2, 32], strides = [1, 1]} : vector<2x128xf32> to vector<2x32xf32>
    %cst_18 = arith.constant 5.000000e-01 : f32
    %30 = vector.broadcast %cst_18 : f32 to vector<2x32xf32>
    %31 = arith.mulf %30, %29 : vector<2x32xf32>
    %32 = math.tanh %31 : vector<2x32xf32>
    %cst_19 = arith.constant 5.000000e-01 : f32
    %33 = vector.broadcast %cst_19 : f32 to vector<2x32xf32>
    %34 = arith.mulf %33, %32 : vector<2x32xf32>
    %cst_20 = arith.constant 5.000000e-01 : f32
    %35 = vector.broadcast %cst_20 : f32 to vector<2x32xf32>
    %36 = arith.addf %34, %35 : vector<2x32xf32>
    %37 = arith.mulf %10, %26 : vector<2x32xf32>
    %38 = arith.mulf %18, %28 : vector<2x32xf32>
    %39 = arith.addf %37, %38 : vector<2x32xf32>
    %40 = math.tanh %39 : vector<2x32xf32>
    %41 = arith.mulf %36, %40 : vector<2x32xf32>
    %c0_21 = arith.constant 0 : index
    %c0_22 = arith.constant 0 : index
    %42 = vector.load %arg7[%c0_21, %c0_22] : memref<2x32xf32, #tpu.memory_space<vmem>>, vector<2x32xf32>
    tpu.vector_store %arg7[%c0_21, %c0_22], %41 {strides = array<i32>} : memref<2x32xf32, #tpu.memory_space<vmem>>, vector<2x32xf32>,
    %c0_23 = arith.constant 0 : index
    %c0_24 = arith.constant 0 : index
    %43 = vector.load %arg8[%c0_23, %c0_24] : memref<2x32xf32, #tpu.memory_space<vmem>>, vector<2x32xf32>
    tpu.vector_store %arg8[%c0_23, %c0_24], %39 {strides = array<i32>} : memref<2x32xf32, #tpu.memory_space<vmem>>, vector<2x32xf32>,
    return
  }
  func.func @transform_0(%arg0: i32) -> (i32, i32) {
    %c0_i32 = arith.constant 0 : i32
    %c0_i32_0 = arith.constant 0 : i32
    return %arg0, %c0_i32 : i32, i32
  }
  func.func @transform_1(%arg0: i32) -> (i32, i32) {
    %c0_i32 = arith.constant 0 : i32
    %c0_i32_0 = arith.constant 0 : i32
    return %arg0, %c0_i32 : i32, i32
  }
  func.func @transform_2(%arg0: i32) -> (i32, i32) {
    %c0_i32 = arith.constant 0 : i32
    %c0_i32_0 = arith.constant 0 : i32
    return %arg0, %c0_i32 : i32, i32
  }
  func.func @transform_3(%arg0: i32) -> (i32, i32) {
    %c0_i32 = arith.constant 0 : i32
    %c0_i32_0 = arith.constant 0 : i32
    %c0_i32_1 = arith.constant 0 : i32
    return %c0_i32, %c0_i32_0 : i32, i32
  }
  func.func @transform_4(%arg0: i32) -> (i32, i32) {
    %c0_i32 = arith.constant 0 : i32
    %c0_i32_0 = arith.constant 0 : i32
    %c0_i32_1 = arith.constant 0 : i32
    return %c0_i32, %c0_i32_0 : i32, i32
  }
  func.func @transform_5(%arg0: i32) -> (i32, i32) {
    %c0_i32 = arith.constant 0 : i32
    %c0_i32_0 = arith.constant 0 : i32
    %c0_i32_1 = arith.constant 0 : i32
    return %c0_i32, %c0_i32_0 : i32, i32
  }
  func.func @transform_6(%arg0: i32) -> (i32, i32) {
    %c0_i32 = arith.constant 0 : i32
    %c0_i32_0 = arith.constant 0 : i32
    return %arg0, %c0_i32 : i32, i32
  }
  func.func @transform_7(%arg0: i32) -> (i32, i32) {
    %c0_i32 = arith.constant 0 : i32
    %c0_i32_0 = arith.constant 0 : i32
    return %arg0, %c0_i32 : i32, i32
  }
}

</mosaic_0001>

<llo_original>
// kernel: lstm_cell_pallas.1
$region0: #{lstm_cell_pallas.1}
  #allocation0 [shape = 'u32[]', space=smem, size = 0x4, offset = 0x4, fixed_abs, tag = 'smem constant byte address 0x4 - core index']
  #allocation1 [shape = 'u32[144,128]{1,0:T(1,128)}', space=vmem, size = 0x12000, scoped, tag = 'internal scratch']
  %s0 = inlined_call_operand.hbm [shape: f32[2,16], index: 0, kind: input, shape index: {}]
  %s1 = inlined_call_operand.hbm [shape: f32[2,32], index: 1, kind: input, shape index: {}]
  %s2 = inlined_call_operand.hbm [shape: f32[2,32], index: 2, kind: input, shape index: {}]
  %s3 = inlined_call_operand.hbm [shape: f32[16,128], index: 3, kind: input, shape index: {}]
  %s4 = inlined_call_operand.hbm [shape: f32[32,128], index: 4, kind: input, shape index: {}]
  %s5 = inlined_call_operand.hbm [shape: f32[1,128], index: 5, kind: input, shape index: {}]
  %s6 = inlined_call_operand.hbm [shape: f32[2,32], index: 6, kind: output, shape index: {0}]
  %s7 = inlined_call_operand.hbm [shape: f32[2,32], index: 7, kind: output, shape index: {1}]
  %8 = xla_tuple %s6, %s7
  %s9 = sld [smem:[#allocation0]]
  $region66: #{lstm_cell_pallas.1} parent=0
    _
  %s11 = ssub.s32 1, %s9
  %s12 = scalar_select 0, %s11, %s9
  $region1: #{lstm_cell_pallas.1} parent=0
    #allocation2 [shape = 'u8[1024]{0}', space=vmem, size = 0x400, scoped, tag = 'input window, operand 0, single buffered']
    #allocation3 [shape = 's32[1]{0}', space=sflag, size = 0x4, scoped, tag = 'scoped memory for lstm_cell_pallas.1']
    #allocation4 [shape = 's32[1]{0}', space=sflag, size = 0x4, scoped, tag = 'scoped memory for lstm_cell_pallas.1']
    #allocation5 [shape = 'u8[1024]{0}', space=vmem, size = 0x400, scoped, tag = 'input window, operand 1, single buffered']
    #allocation6 [shape = 's32[1]{0}', space=sflag, size = 0x4, scoped, tag = 'scoped memory for lstm_cell_pallas.1']
    #allocation7 [shape = 'u8[1024]{0}', space=vmem, size = 0x400, scoped, tag = 'input window, operand 2, single buffered']
    #allocation8 [shape = 'u8[8192]{0}', space=vmem, size = 0x2000, scoped, tag = 'input window, operand 3, single buffered']
    #allocation9 [shape = 's32[1]{0}', space=sflag, size = 0x4, scoped, tag = 'scoped memory for lstm_cell_pallas.1']
    #allocation10 [shape = 'u8[16384]{0}', space=vmem, size = 0x4000, scoped, tag = 'input window, operand 4, single buffered']
    #allocation11 [shape = 'u8[512]{0}', space=vmem, size = 0x400, scoped, tag = 'input window, operand 5, single buffered']
    #allocation12 [shape = 's32[1]{0}', space=sflag, size = 0x4, scoped, tag = 'scoped memory for lstm_cell_pallas.1']
    #allocation13 [shape = 'u8[1024]{0}', space=vmem, size = 0x400, scoped, tag = 'output window, operand 0, single buffered']
    #allocation14 [shape = 'u8[1024]{0}', space=vmem, size = 0x400, scoped, tag = 'output window, operand 1, single buffered']
    #allocation15 [shape = 's32[1]{0}', space=sflag, size = 0x4, scoped, tag = 'scoped memory for lstm_cell_pallas.1']
    %13 = vsyncpa [#allocation3], 0
    %14 = vsyncpa [#allocation6], 0
    %15 = vsyncpa [#allocation9], 0
    %16 = vsyncpa [#allocation12], 0
    %17 = vsyncpa [#allocation4], 0
    %18 = vsyncpa [#allocation15], 0
    // Predicated region
    $region2: #{lstm_cell_pallas.1} parent=1 // pred_check
      _
    $region3: #{lstm_cell_pallas.1} parent=1 // pred_check_branch
      %20 = sbr.rel (0) target = $region5
    $region4: #{lstm_cell_pallas.1} parent=1 // pred_region
      %s22 = ssub.s32 32, 32
      %23 = vsyncadd [#allocation3], %s22
      %s25 = sshll.u32 [#allocation2], 4
      %s26 = int_to_ptr.vmem [resolvable:$true] %s25
      %28 = dma.hbm_to_vmem [thread:$0]  %s0, 32, %s26, [#allocation3]
    $region5: #{lstm_cell_pallas.1} parent=1 // pred_fallthru
      _
    // Predicated region
    $region6: #{lstm_cell_pallas.1} parent=1 // pred_check
      _
    $region7: #{lstm_cell_pallas.1} parent=1 // pred_check_branch
      %30 = sbr.rel (0) target = $region9
    $region8: #{lstm_cell_pallas.1} parent=1 // pred_region
      %s32 = ssub.s32 32, 32
      %33 = vsyncadd [#allocation6], %s32
      %s35 = sshll.u32 [#allocation5], 4
      %s36 = int_to_ptr.vmem [resolvable:$true] %s35
      %38 = dma.hbm_to_vmem [thread:$0]  %s1, 32, %s36, [#allocation6]
    $region9: #{lstm_cell_pallas.1} parent=1 // pred_fallthru
      _
    // Predicated region
    $region10: #{lstm_cell_pallas.1} parent=1 // pred_check
      _
    $region11: #{lstm_cell_pallas.1} parent=1 // pred_check_branch
      %40 = sbr.rel (0) target = $region13
    $region12: #{lstm_cell_pallas.1} parent=1 // pred_region
      %s42 = ssub.s32 32, 32
      %43 = vsyncadd [#allocation6], %s42
      %s45 = sshll.u32 [#allocation7], 4
      %s46 = int_to_ptr.vmem [resolvable:$true] %s45
      %48 = dma.hbm_to_vmem [thread:$0]  %s2, 32, %s46, [#allocation6]
    $region13: #{lstm_cell_pallas.1} parent=1 // pred_fallthru
      _
    // Predicated region
    $region14: #{lstm_cell_pallas.1} parent=1 // pred_check
      _
    $region15: #{lstm_cell_pallas.1} parent=1 // pred_check_branch
      %50 = sbr.rel (0) target = $region17
    $region16: #{lstm_cell_pallas.1} parent=1 // pred_region
      %s52 = ssub.s32 256, 256
      %53 = vsyncadd [#allocation9], %s52
      %s54 = sshll.u32 [#allocation8], 4
      %s55 = int_to_ptr.vmem [resolvable:$true] %s54
      %60 = dma.hbm_to_vmem [thread:$0]  %s3, 256, %s55, [#allocation9], 128, 128, 8
    $region17: #{lstm_cell_pallas.1} parent=1 // pred_fallthru
      _
    // Predicated region
    $region18: #{lstm_cell_pallas.1} parent=1 // pred_check
      _
    $region19: #{lstm_cell_pallas.1} parent=1 // pred_check_branch
      %62 = sbr.rel (0) target = $region21
    $region20: #{lstm_cell_pallas.1} parent=1 // pred_region
      %s64 = ssub.s32 512, 512
      %65 = vsyncadd [#allocation9], %s64
      %s66 = sshll.u32 [#allocation10], 4
      %s67 = int_to_ptr.vmem [resolvable:$true] %s66
      %72 = dma.hbm_to_vmem [thread:$0]  %s4, 512, %s67, [#allocation9], 128, 128, 8
    $region21: #{lstm_cell_pallas.1} parent=1 // pred_fallthru
      _
    // Predicated region
    $region22: #{lstm_cell_pallas.1} parent=1 // pred_check
      _
    $region23: #{lstm_cell_pallas.1} parent=1 // pred_check_branch
      %74 = sbr.rel (0) target = $region25
    $region24: #{lstm_cell_pallas.1} parent=1 // pred_region
      %s76 = ssub.s32 16, 16
      %77 = vsyncadd [#allocation12], %s76
      %s79 = sshll.u32 [#allocation11], 4
      %s80 = int_to_ptr.vmem [resolvable:$true] %s79
      %82 = dma.hbm_to_vmem [thread:$0]  %s5, 16, %s80, [#allocation12]
    $region25: #{lstm_cell_pallas.1} parent=1 // pred_fallthru
      _
    // Predicated region
    $region26: #{lstm_cell_pallas.1} parent=1 // pred_check
      _
    $region27: #{lstm_cell_pallas.1} parent=1 // pred_check_branch
      %84 = sbr.rel (0) target = $region29
    $region28: #{lstm_cell_pallas.1} parent=1 // pred_region
      %85 = dma.done [#allocation3], 32
    $region29: #{lstm_cell_pallas.1} parent=1 // pred_fallthru
      _
    // Predicated region
    $region30: #{lstm_cell_pallas.1} parent=1 // pred_check
      _
    $region31: #{lstm_cell_pallas.1} parent=1 // pred_check_branch
      %87 = sbr.rel (0) target = $region33
    $region32: #{lstm_cell_pallas.1} parent=1 // pred_region
      %88 = dma.done [#allocation6], 32
    $region33: #{lstm_cell_pallas.1} parent=1 // pred_fallthru
      _
    // Predicated region
    $region34: #{lstm_cell_pallas.1} parent=1 // pred_check
      _
    $region35: #{lstm_cell_pallas.1} parent=1 // pred_check_branch
      %90 = sbr.rel (0) target = $region37
    $region36: #{lstm_cell_pallas.1} parent=1 // pred_region
      %91 = dma.done [#allocation6], 32
    $region37: #{lstm_cell_pallas.1} parent=1 // pred_fallthru
      _
    // Predicated region
    $region38: #{lstm_cell_pallas.1} parent=1 // pred_check
      _
    $region39: #{lstm_cell_pallas.1} parent=1 // pred_check_branch
      %93 = sbr.rel (0) target = $region41
    $region40: #{lstm_cell_pallas.1} parent=1 // pred_region
      %94 = dma.done [#allocation9], 256
    $region41: #{lstm_cell_pallas.1} parent=1 // pred_fallthru
      _
    // Predicated region
    $region42: #{lstm_cell_pallas.1} parent=1 // pred_check
      _
    $region43: #{lstm_cell_pallas.1} parent=1 // pred_check_branch
      %96 = sbr.rel (0) target = $region45
    $region44: #{lstm_cell_pallas.1} parent=1 // pred_region
      %97 = dma.done [#allocation9], 512
    $region45: #{lstm_cell_pallas.1} parent=1 // pred_fallthru
      _
    // Predicated region
    $region46: #{lstm_cell_pallas.1} parent=1 // pred_check
      _
    $region47: #{lstm_cell_pallas.1} parent=1 // pred_check_branch
      %99 = sbr.rel (0) target = $region49
    $region48: #{lstm_cell_pallas.1} parent=1 // pred_region
      %100 = dma.done [#allocation12], 16
    $region49: #{lstm_cell_pallas.1} parent=1 // pred_fallthru
      _
    %v101 = vld [vmem:[#allocation2] sm:$0x3]
    %v102 = vld [vmem:[#allocation8] sm:$0xff]
    %v103 = vld [vmem:[#allocation8 + $0x8] sm:$0xff]
    %v104 = vld [vmem:[#allocation5] sm:$0x3]
    %v105 = vld [vmem:[#allocation10] sm:$0xff]
    %v106 = vld [vmem:[#allocation10 + $0x8] sm:$0xff]
    %v107 = vld [vmem:[#allocation10 + $0x10] sm:$0xff]
    %v108 = vld [vmem:[#allocation10 + $0x18] sm:$0xff]
    %vm109 = vcmask 261120
    %v111 = vsel %vm109, %v104, 0
    %113 = vmatprep.subr.mxu0 0.0
    %114 = vmatpush1.msra.mxu0 %v105
    %115 = vmatprep.subr.mxu0 0.0
    %116 = vmatpush1.msra.mxu0 %v106
    %117 = vmatprep.subr.mxu0 0.0
    %118 = vmatpush1.msra.mxu0 %v107
    %119 = vmatprep.subr.mxu0 0.0
    %120 = vmatpush1.msra.mxu0 %v108
    %121 = vmatprep.subr.mxu0 0.0
    %122 = vmatpush1.msra.mxu0 0.0
    %123 = vmatprep.subr.mxu0 0.0
    %124 = vmatpush1.msra.mxu0 0.0
    %125 = vmatprep.subr.mxu0 0.0
    %126 = vmatpush1.msra.mxu0 0.0
    %127 = vmatprep.subr.mxu0 0.0
    %128 = vmatpush1.msra.mxu0 0.0
    %129 = vmatprep.subr.mxu0 0.0
    %130 = vmatpush1.msra.mxu0 0.0
    %131 = vmatprep.subr.mxu0 0.0
    %132 = vmatpush1.msra.mxu0 0.0
    %133 = vmatprep.subr.mxu0 0.0
    %134 = vmatpush1.msra.mxu0 0.0
    %135 = vmatprep.subr.mxu0 0.0
    %136 = vmatpush1.msra.mxu0 0.0
    %137 = vmatprep.subr.mxu0 0.0
    %138 = vmatpush1.msra.mxu0 0.0
    %139 = vmatprep.subr.mxu0 0.0
    %140 = vmatpush1.msra.mxu0 0.0
    %141 = vmatprep.subr.mxu0 0.0
    %142 = vmatpush1.msra.mxu0 0.0
    %143 = vmatprep.subr.mxu0 0.0
    %144 = vmatpush1.msra.mxu0 0.0
    %145 = vmatprep.subr.mxu0 0.0
    %146 = vmatpush1.msra.mxu0 0.0
    %147 = vmatprep.subr.mxu0 0.0
    %148 = vmatpush1.msra.mxu0 0.0
    %149 = vmatprep.subr.mxu0 0.0
    %150 = vmatpush1.msra.mxu0 0.0
    %151 = vmatprep.subr.mxu0 0.0
    %152 = vmatpush1.msra.mxu0 0.0
    %153 = vmatprep.subr.mxu0 0.0
    %154 = vmatpush1.msra.mxu0 0.0
    %155 = vmatprep.subr.mxu0 0.0
    %156 = vmatpush1.msra.mxu0 0.0
    %157 = vmatprep.subr.mxu0 0.0
    %158 = vmatpush1.msra.mxu0 0.0
    %159 = vmatprep.subr.mxu0 0.0
    %160 = vmatpush1.msra.mxu0 0.0
    %161 = vmatprep.subr.mxu0 0.0
    %162 = vmatpush1.msra.mxu0 0.0
    %163 = vmatprep.subr.mxu0 0.0
    %164 = vmatpush1.msra.mxu0 0.0
    %165 = vmatprep.subr.mxu0 0.0
    %166 = vmatpush1.msra.mxu0 0.0
    %167 = vmatprep.subr.mxu0 0.0
    %168 = vmatpush1.msra.mxu0 0.0
    %169 = vmatprep.subr.mxu0 0.0
    %170 = vmatpush1.msra.mxu0 0.0
    %171 = vmatprep.subr.mxu0 0.0
    %172 = vmatpush1.msra.mxu0 0.0
    %173 = vmatprep.subr.mxu0 0.0
    %174 = vmatpush1.msra.mxu0 0.0
    %175 = vmatprep.subr.mxu0 0.0
    %176 = vmatpush1.msra.mxu0 0.0
    %177 = vmatprep.mubr.f32.mxu0 0.0
    %178 = vmatmul.mubr.f32.gmra.mrb[0].mxu0 %v111
    %v179 = vpop.f32.mrb[0].mxu0
    %v180 = vadd.f32 0.0, %v179
    %v181 = vpop.f32.mrb[0].mxu0
    %182 = vdwg.mxu0
    %vm183 = vcmask 130048
    %v185 = vsel %vm183, %v101, 0
    %187 = vmatprep.subr.mxu0 0.0
    %188 = vmatpush1.msra.mxu0 %v102
    %189 = vmatprep.subr.mxu0 0.0
    %190 = vmatpush1.msra.mxu0 %v103
    %191 = vmatprep.subr.mxu0 0.0
    %192 = vmatpush1.msra.mxu0 0.0
    %193 = vmatprep.subr.mxu0 0.0
    %194 = vmatpush1.msra.mxu0 0.0
    %195 = vmatprep.subr.mxu0 0.0
    %196 = vmatpush1.msra.mxu0 0.0
    %197 = vmatprep.subr.mxu0 0.0
    %198 = vmatpush1.msra.mxu0 0.0
    %199 = vmatprep.subr.mxu0 0.0
    %200 = vmatpush1.msra.mxu0 0.0
    %201 = vmatprep.subr.mxu0 0.0
    %202 = vmatpush1.msra.mxu0 0.0
    %203 = vmatprep.subr.mxu0 0.0
    %204 = vmatpush1.msra.mxu0 0.0
    %205 = vmatprep.subr.mxu0 0.0
    %206 = vmatpush1.msra.mxu0 0.0
    %207 = vmatprep.subr.mxu0 0.0
    %208 = vmatpush1.msra.mxu0 0.0
    %209 = vmatprep.subr.mxu0 0.0
    %210 = vmatpush1.msra.mxu0 0.0
    %211 = vmatprep.subr.mxu0 0.0
    %212 = vmatpush1.msra.mxu0 0.0
    %213 = vmatprep.subr.mxu0 0.0
    %214 = vmatpush1.msra.mxu0 0.0
    %215 = vmatprep.subr.mxu0 0.0
    %216 = vmatpush1.msra.mxu0 0.0
    %217 = vmatprep.subr.mxu0 0.0
    %218 = vmatpush1.msra.mxu0 0.0
    %219 = vmatprep.subr.mxu0 0.0
    %220 = vmatpush1.msra.mxu0 0.0
    %221 = vmatprep.subr.mxu0 0.0
    %222 = vmatpush1.msra.mxu0 0.0
    %223 = vmatprep.subr.mxu0 0.0
    %224 = vmatpush1.msra.mxu0 0.0
    %225 = vmatprep.subr.mxu0 0.0
    %226 = vmatpush1.msra.mxu0 0.0
    %227 = vmatprep.subr.mxu0 0.0
    %228 = vmatpush1.msra.mxu0 0.0
    %229 = vmatprep.subr.mxu0 0.0
    %230 = vmatpush1.msra.mxu0 0.0
    %231 = vmatprep.subr.mxu0 0.0
    %232 = vmatpush1.msra.mxu0 0.0
    %233 = vmatprep.subr.mxu0 0.0
    %234 = vmatpush1.msra.mxu0 0.0
    %235 = vmatprep.subr.mxu0 0.0
    %236 = vmatpush1.msra.mxu0 0.0
    %237 = vmatprep.subr.mxu0 0.0
    %238 = vmatpush1.msra.mxu0 0.0
    %239 = vmatprep.subr.mxu0 0.0
    %240 = vmatpush1.msra.mxu0 0.0
    %241 = vmatprep.subr.mxu0 0.0
    %242 = vmatpush1.msra.mxu0 0.0
    %243 = vmatprep.subr.mxu0 0.0
    %244 = vmatpush1.msra.mxu0 0.0
    %245 = vmatprep.subr.mxu0 0.0
    %246 = vmatpush1.msra.mxu0 0.0
    %247 = vmatprep.subr.mxu0 0.0
    %248 = vmatpush1.msra.mxu0 0.0
    %249 = vmatprep.subr.mxu0 0.0
    %250 = vmatpush1.msra.mxu0 0.0
    %251 = vmatprep.mubr.f32.mxu0 0.0
    %252 = vmatmul.mubr.f32.gmra.mrb[0].mxu0 %v185
    %v253 = vpop.f32.mrb[0].mxu0
    %v254 = vadd.f32 %v180, %v253
    %v255 = vpop.f32.mrb[0].mxu0
    %256 = vdwg.mxu0
    %v257 = vld [vmem:[#allocation11] sm:$0x1]
    %v259 = vlaneseq
    %v260 = vshrl.u32 %v259, 7
    %v261 = vsub.s32 0, %v260
    %v262 = vrot.slane %v257, %v261
    %v264 = vadd.f32 %v254, %v262
    %v265 = vld [vmem:[#allocation7] sm:$0x3]
    %v266 = vmul.f32 %v264, 0.5
    %v267 = vtanh.pop %v266
    %v268 = vmul.f32 %v267, 0.5
    %v269 = vadd.f32 %v268, 0.5
    %v270 = vtanh.pop %v264
    %272 = vrot.lane.b32.xlu0 %v269, 96
    %v273 = vpop.permute.xlu0 %272
    %v275 = vmul.f32 %v265, %v273
    %277 = vrot.lane.b32.xlu0 %v270, 64
    %v278 = vpop.permute.xlu0 %277
    %v280 = vmul.f32 %v269, %v278
    %v281 = vadd.f32 %v275, %v280
    %v282 = vtanh.pop %v281
    %284 = vrot.lane.b32.xlu0 %v282, 96
    %v285 = vpop.permute.xlu0 %284
    %v287 = vmul.f32 %v269, %v285
    %289 = vrot.lane.b32.xlu0 %v287, 32
    %v290 = vpop.permute.xlu0 %289
    %vm292 = vcmask 254976
    %293 = vst.msk [vmem:[#allocation13] sm:$0x3] %vm292, %v290
    %294 = vst.msk [vmem:[#allocation14] sm:$0x3] %vm292, %v281
    // Predicated region
    $region50: #{lstm_cell_pallas.1} parent=1 // pred_check
      _
    $region51: #{lstm_cell_pallas.1} parent=1 // pred_check_branch
      %296 = sbr.rel (0) target = $region53
    $region52: #{lstm_cell_pallas.1} parent=1 // pred_region
      %s298 = ssub.s32 32, 32
      %299 = vsyncadd [#allocation4], %s298
      %s301 = sshll.u32 [#allocation13], 4
      %s302 = int_to_ptr.vmem [resolvable:$true] %s301
      %304 = dma.vmem_to_hbm [thread:$0]  %s302, 32, %s6, [#allocation4]
    $region53: #{lstm_cell_pallas.1} parent=1 // pred_fallthru
      _
    // Predicated region
    $region54: #{lstm_cell_pallas.1} parent=1 // pred_check
      _
    $region55: #{lstm_cell_pallas.1} parent=1 // pred_check_branch
      %306 = sbr.rel (0) target = $region57
    $region56: #{lstm_cell_pallas.1} parent=1 // pred_region
      %s308 = ssub.s32 32, 32
      %309 = vsyncadd [#allocation15], %s308
      %s311 = sshll.u32 [#allocation14], 4
      %s312 = int_to_ptr.vmem [resolvable:$true] %s311
      %314 = dma.vmem_to_hbm [thread:$0]  %s312, 32, %s7, [#allocation15]
    $region57: #{lstm_cell_pallas.1} parent=1 // pred_fallthru
      _
    // Predicated region
    $region58: #{lstm_cell_pallas.1} parent=1 // pred_check
      _
    $region59: #{lstm_cell_pallas.1} parent=1 // pred_check_branch
      %316 = sbr.rel (0) target = $region61
    $region60: #{lstm_cell_pallas.1} parent=1 // pred_region
      %317 = dma.done [#allocation4], 32
    $region61: #{lstm_cell_pallas.1} parent=1 // pred_fallthru
      _
    // Predicated region
    $region62: #{lstm_cell_pallas.1} parent=1 // pred_check
      _
    $region63: #{lstm_cell_pallas.1} parent=1 // pred_check_branch
      %319 = sbr.rel (0) target = $region65
    $region64: #{lstm_cell_pallas.1} parent=1 // pred_region
      %320 = dma.done [#allocation15], 32
    $region65: #{lstm_cell_pallas.1} parent=1 // pred_fallthru
      _
    %321 = vsyncpa [#allocation3], 1
    %322 = vsyncpa [#allocation6], 1
    %323 = vsyncpa [#allocation9], 1
    %324 = vsyncpa [#allocation12], 1
    %325 = vsyncpa [#allocation4], 1
    %326 = vsyncpa [#allocation15], 1

</llo_original>
